<compile_context>
chip_gen: v7x
topology: tpu7x:2x2x1
jax: 0.10.0
libtpu: 0.0.40
codegen_flags: <defaults>
</compile_context>

<pallas_src>
import math

import jax
import jax.numpy as jnp
from jax.experimental import pallas as pl
from jax.experimental.pallas import tpu as pltpu

LANE = 128
_SUBLANE = 8


def _round_up(x, m):
    return (x + m - 1) // m * m


def _gelu_tanh(x):
    # tanh-approximate GELU (tanh on EUP, polynomial on VPU).
    c = 0.7978845608028654  # sqrt(2/pi)
    return 0.5 * x * (1.0 + jnp.tanh(c * (x + 0.044715 * x * x * x)))


# ----------------------------------------------------------------------------- kernel
def ffnn_kernel(x_ref, w1_ref, b1_ref, w2_ref, b2_ref, o_ref, acc_ref):
    """One (row-block, hidden-chunk) grid step of the fused FFNN."""
    hk = pl.program_id(1)

    @pl.when(hk == 0)
    def _init():
        acc_ref[...] = jnp.zeros_like(acc_ref)

    # linear1 (hidden chunk) + bias, f32 accumulation on the MXU.
    h = jnp.dot(x_ref[...], w1_ref[...], preferred_element_type=jnp.float32)
    h = h + b1_ref[...].astype(jnp.float32)
    # dropout (eval mode) == identity
    h = _gelu_tanh(h)
    # Feed the second MXU pass the parameter dtype (no-op for f32; halves the
    # (tile_m, tile_h) operand footprint for bf16 params).
    h = h.astype(w2_ref.dtype)
    acc_ref[...] += jnp.dot(h, w2_ref[...], preferred_element_type=jnp.float32)

    @pl.when(hk == pl.num_programs(1) - 1)
    def _store():
        o_ref[...] = (acc_ref[...] + b2_ref[...].astype(jnp.float32)).astype(o_ref.dtype)


# ---------------------------------------------------------------- hardware / tiling
def _vmem_budget_bytes():
    phys = 64 << 20  # conservative default: v7x per-TensorCore VMEM
    try:
        phys = int(pltpu.get_tpu_info().vmem_capacity_bytes)
    except Exception:
        pass
    # 75% of physical => ~48 MiB on v7x, ~96 MiB on v5e/v6e; well above the
    # 16/32 MiB default scoped limits, with headroom for compiler temps.
    return max(phys * 3 // 4, 16 << 20)


def _num_tensorcores():
    try:
        kind = jax.devices()[0].device_kind.lower()
        return 2 if ("v7" in kind or "7x" in kind) else 1
    except Exception:
        return 1


def _block_vmem_bytes(tile_m, tile_h, D, Cp, x_bytes, w_bytes, o_bytes):
    return (2 * tile_m * D * x_bytes          # x rows (double-buffered)
            + 2 * D * tile_h * w_bytes        # W1^T chunk
            + 2 * tile_h * w_bytes            # b1 chunk
            + 2 * tile_h * Cp * w_bytes       # W2^T chunk
            + 2 * Cp * w_bytes                # b2
            + 2 * tile_m * Cp * o_bytes       # output block
            + tile_m * Cp * 4                 # f32 accumulator scratch
            + tile_m * tile_h * 4)            # h intermediate (vreg/VMEM temps)


def _choose_tiles(M, D, Hp, Cp, x_bytes, w_bytes, o_bytes, budget, cores):
    # Hidden chunk: largest multiple of 128 that divides Hp and is <= 512
    # (the reduction axis must NOT be ragged).
    if Hp <= 512:
        tile_h = Hp
    else:
        tile_h = LANE
        for cand in range(512, LANE - 1, -LANE):
            if Hp % cand == 0:
                tile_h = cand
                break

    # Row tile: largest multiple of 8 (<=1024 rows) fitting the byte budget.
    m_aligned = _round_up(max(M, 1), _SUBLANE)
    cap = min(1024, m_aligned)
    if cores >= 2 and m_aligned >= 2 * _SUBLANE:
        # Only split rows when there are >=2 TensorCores to shard across (v7x).
        cap = min(cap, _round_up(pl.cdiv(m_aligned, cores), _SUBLANE))
    tile_m = cap
    while tile_m > _SUBLANE and _block_vmem_bytes(
            tile_m, tile_h, D, Cp, x_bytes, w_bytes, o_bytes) > budget:
        tile_m = _round_up(tile_m // 2, _SUBLANE)
    while tile_h > LANE and _block_vmem_bytes(
            tile_m, tile_h, D, Cp, x_bytes, w_bytes, o_bytes) > budget:
        nxt = tile_h - LANE
        while nxt > LANE and Hp % nxt != 0:
            nxt -= LANE
        tile_h = nxt

    if tile_m >= M:
        tile_m = M  # single row block: block == full dim is always legal
    return tile_m, tile_h


# -------------------------------------------------------------------------- wrappers
def prepare_ffnn_params(w1, b1, w2, b2, *, param_dtype=None):
    """One-time parameter prep (hoisted out of the per-call path).

    Transposes to (in, out) layout and zero-pads hidden/class dims to lane
    multiples.  Zero padding is exact: padded hidden lanes see zero W1 columns +
    zero bias -> gelu(0) == 0 and meet zero W2 rows; padded class lanes are
    sliced off by the caller.
    """
    H, D = w1.shape
    C, H2 = w2.shape
    assert H2 == H and b1.shape == (H,) and b2.shape == (C,)
    Hp, Cp = _round_up(H, LANE), _round_up(C, LANE)
    w1t = jnp.pad(w1.T, ((0, 0), (0, Hp - H)))           # (D, Hp)
    b1p = jnp.pad(b1, (0, Hp - H)).reshape(1, Hp)
    w2t = jnp.pad(w2.T, ((0, Hp - H), (0, Cp - C)))      # (Hp, Cp)
    b2p = jnp.pad(b2, (0, Cp - C)).reshape(1, Cp)
    if param_dtype is not None:
        w1t, b1p, w2t, b2p = (a.astype(param_dtype) for a in (w1t, b1p, w2t, b2p))
    return w1t, b1p, w2t, b2p


def ffnn_forward(x, w1t, b1p, w2t, b2p, *, cls_num):
    """Fused Linear -> Dropout(eval) -> GELU -> Linear forward.

    x: (..., input_dim); params pre-prepared by prepare_ffnn_params.
    """
    *lead, D = x.shape
    Dw, Hp = w1t.shape
    Hp2, Cp = w2t.shape
    assert Dw == D and Hp2 == Hp and cls_num <= Cp

    M = math.prod(lead) if lead else 1
    x2 = x.reshape(M, D)                         # view-only reshape, no HBM copy
    x_bytes = x2.dtype.itemsize
    w_bytes = w1t.dtype.itemsize
    o_bytes = x2.dtype.itemsize

    budget = _vmem_budget_bytes()
    cores = _num_tensorcores()
    tile_m, tile_h = _choose_tiles(M, D, Hp, Cp, x_bytes, w_bytes, o_bytes, budget, cores)

    grid_m = pl.cdiv(M, tile_m)                  # ragged last row block is fine
    grid_h = Hp // tile_h                        # reduction axis never ragged

    cost = pl.CostEstimate(
        flops=2 * M * D * Hp + 2 * M * Hp * Cp,
        transcendentals=M * Hp,
        bytes_accessed=(M * D * x_bytes
                        + grid_m * (D * Hp + Hp * Cp + Hp + Cp) * w_bytes
                        + M * Cp * o_bytes),
    )

    out = pl.pallas_call(
        ffnn_kernel,
        out_shape=jax.ShapeDtypeStruct((M, Cp), x.dtype),
        grid_spec=pltpu.PrefetchScalarGridSpec(
            num_scalar_prefetch=0,
            grid=(grid_m, grid_h),
            in_specs=[
                pl.BlockSpec((tile_m, D), lambda i, h: (i, 0)),    # x rows
                pl.BlockSpec((D, tile_h), lambda i, h: (0, h)),    # W1^T chunk
                pl.BlockSpec((1, tile_h), lambda i, h: (0, h)),    # b1 chunk
                pl.BlockSpec((tile_h, Cp), lambda i, h: (h, 0)),   # W2^T chunk
                pl.BlockSpec((1, Cp), lambda i, h: (0, 0)),        # b2
            ],
            out_specs=pl.BlockSpec((tile_m, Cp), lambda i, h: (i, 0)),
            scratch_shapes=[pltpu.VMEM((tile_m, Cp), jnp.float32)],
        ),
        compiler_params=pltpu.CompilerParams(
            dimension_semantics=("parallel", "arbitrary"),
            vmem_limit_bytes=int(budget),
        ),
        cost_estimate=cost,
    )(x2, w1t, b1p, w2t, b2p)

    return out[:, :cls_num].reshape(*lead, cls_num)


def ffnn_reference(x, w1, b1, w2, b2):
    h = _gelu_tanh(jnp.matmul(x, w1.T) + b1)
    return jnp.matmul(h, w2.T) + b2


if __name__ == "__main__":
    # Small shapes consistent with the module: (batch=2, seq=8, input_dim=32),
    # hid_dim=64, cls_num=8.
    B, L, D_IN, HID, CLS = 2, 8, 32, 64, 8

    key = jax.random.PRNGKey(0)
    kx, kw1, kb1, kw2, kb2 = jax.random.split(key, 5)

    x = jax.random.normal(kx, (B, L, D_IN), dtype=jnp.float32)

    # Deterministic nn.Linear-style init: U(-1/sqrt(fan_in), 1/sqrt(fan_in)).
    bnd1 = 1.0 / math.sqrt(D_IN)
    w1 = jax.random.uniform(kw1, (HID, D_IN), jnp.float32, -bnd1, bnd1)
    b1 = jax.random.uniform(kb1, (HID,), jnp.float32, -bnd1, bnd1)
    bnd2 = 1.0 / math.sqrt(HID)
    w2 = jax.random.uniform(kw2, (CLS, HID), jnp.float32, -bnd2, bnd2)
    b2 = jax.random.uniform(kb2, (CLS,), jnp.float32, -bnd2, bnd2)

    # One-time parameter prep (hoisted out of the per-call path).
    w1t, b1p, w2t, b2p = prepare_ffnn_params(w1, b1, w2, b2)

    out = ffnn_forward(x, w1t, b1p, w2t, b2p, cls_num=CLS)
    out = jax.block_until_ready(out)

    ref = ffnn_reference(x, w1, b1, w2, b2)
    assert out.shape == (B, L, CLS)
    # Tolerance covers MXU default-precision (single bf16 pass) matmuls vs XLA ref.
    assert jnp.allclose(out, ref, atol=1e-2, rtol=1e-2), "mismatch vs reference"

    print("KERNEL_OK")
</pallas_src>

<mosaic_0001>
module attributes {stable_mosaic.version = 11 : i64} {
  func.func @ffnn_kernel(%arg0: i32, %arg1: i32, %arg2: memref<16x32xf32, #tpu.memory_space<vmem>>, %arg3: memref<32x128xf32, #tpu.memory_space<vmem>>, %arg4: memref<1x128xf32, #tpu.memory_space<vmem>>, %arg5: memref<128x128xf32, #tpu.memory_space<vmem>>, %arg6: memref<1x128xf32, #tpu.memory_space<vmem>>, %arg7: memref<16x128xf32, #tpu.memory_space<vmem>>, %arg8: memref<16x128xf32, #tpu.memory_space<vmem>>) attributes {dimension_semantics = [#tpu.dimension_semantics<parallel>, #tpu.dimension_semantics<arbitrary>], iteration_bounds = array<i64: 1, 1>, scalar_prefetch = 0 : i64, scratch_operands = 1 : i64, tpu.core_type = #tpu.core_type<tc>, window_params = [{transform_indices = @transform_0, window_bounds = array<i64: 16, 32>}, {transform_indices = @transform_1, window_bounds = array<i64: 32, 128>}, {transform_indices = @transform_2, window_bounds = array<i64: 1, 128>}, {transform_indices = @transform_3, window_bounds = array<i64: 128, 128>}, {pipeline_mode = #tpu.pipeline_mode<synchronous>, transform_indices = @transform_4, window_bounds = array<i64: 1, 128>}, {transform_indices = @transform_5, window_bounds = array<i64: 16, 128>}]} {
    %c0_i32 = arith.constant 0 : i32
    %0 = arith.cmpi eq, %arg1, %c0_i32 : i32
    %1 = arith.extui %0 : i1 to i32
    %c0_i32_0 = arith.constant 0 : i32
    %2 = arith.cmpi ne, %1, %c0_i32_0 : i32
    scf.if %2 {
      %cst_19 = arith.constant 0.000000e+00 : f32
      %30 = vector.broadcast %cst_19 : f32 to vector<16x128xf32>
      %c0_20 = arith.constant 0 : index
      %c0_21 = arith.constant 0 : index
      %31 = vector.load %arg8[%c0_20, %c0_21] : memref<16x128xf32, #tpu.memory_space<vmem>>, vector<16x128xf32>
      tpu.vector_store %arg8[%c0_20, %c0_21], %30 {strides = array<i32>} : memref<16x128xf32, #tpu.memory_space<vmem>>, vector<16x128xf32>,
    } else {
    }
    %c0 = arith.constant 0 : index
    %c0_1 = arith.constant 0 : index
    %3 = vector.load %arg2[%c0, %c0_1] : memref<16x32xf32, #tpu.memory_space<vmem>>, vector<16x32xf32>
    %c0_2 = arith.constant 0 : index
    %c0_3 = arith.constant 0 : index
    %4 = vector.load %arg3[%c0_2, %c0_3] : memref<32x128xf32, #tpu.memory_space<vmem>>, vector<32x128xf32>
    %cst = arith.constant dense<0.000000e+00> : vector<16x128xf32>
    %5 = tpu.matmul %3, %4, %cst {dimension_numbers = #tpu.dot_dimension_numbers<[1], [0], [0], [1], [0, 0, 1, 1], [], []>} : vector<16x32xf32>, vector<32x128xf32>, vector<16x128xf32> -> vector<16x128xf32>
    %c0_4 = arith.constant 0 : index
    %c0_5 = arith.constant 0 : index
    %6 = vector.load %arg4[%c0_4, %c0_5] : memref<1x128xf32, #tpu.memory_space<vmem>>, vector<1x128xf32>
    %7 = vector.broadcast %6 : vector<1x128xf32> to vector<16x128xf32>
    %8 = arith.addf %5, %7 : vector<16x128xf32>
    %cst_6 = arith.constant 5.000000e-01 : f32
    %9 = vector.broadcast %cst_6 : f32 to vector<16x128xf32>
    %10 = arith.mulf %9, %8 : vector<16x128xf32>
    %cst_7 = arith.constant 4.471500e-02 : f32
    %11 = vector.broadcast %cst_7 : f32 to vector<16x128xf32>
    %12 = arith.mulf %11, %8 : vector<16x128xf32>
    %13 = arith.mulf %12, %8 : vector<16x128xf32>
    %14 = arith.mulf %13, %8 : vector<16x128xf32>
    %15 = arith.addf %8, %14 : vector<16x128xf32>
    %cst_8 = arith.constant 0.797884583 : f32
    %16 = vector.broadcast %cst_8 : f32 to vector<16x128xf32>
    %17 = arith.mulf %16, %15 : vector<16x128xf32>
    %18 = math.tanh %17 : vector<16x128xf32>
    %cst_9 = arith.constant 1.000000e+00 : f32
    %19 = vector.broadcast %cst_9 : f32 to vector<16x128xf32>
    %20 = arith.addf %19, %18 : vector<16x128xf32>
    %21 = arith.mulf %10, %20 : vector<16x128xf32>
    %c0_10 = arith.constant 0 : index
    %c0_11 = arith.constant 0 : index
    %22 = vector.load %arg8[%c0_10, %c0_11] : memref<16x128xf32, #tpu.memory_space<vmem>>, vector<16x128xf32>
    %c0_12 = arith.constant 0 : index
    %c0_13 = arith.constant 0 : index
    %23 = vector.load %arg5[%c0_12, %c0_13] : memref<128x128xf32, #tpu.memory_space<vmem>>, vector<128x128xf32>
    %cst_14 = arith.constant dense<0.000000e+00> : vector<16x128xf32>
    %24 = tpu.matmul %21, %23, %cst_14 {dimension_numbers = #tpu.dot_dimension_numbers<[1], [0], [0], [1], [0, 0, 1, 1], [], []>} : vector<16x128xf32>, vector<128x128xf32>, vector<16x128xf32> -> vector<16x128xf32>
    %25 = arith.addf %22, %24 : vector<16x128xf32>
    %c0_15 = arith.constant 0 : index
    %c0_16 = arith.constant 0 : index
    %26 = vector.load %arg8[%c0_15, %c0_16] : memref<16x128xf32, #tpu.memory_space<vmem>>, vector<16x128xf32>
    tpu.vector_store %arg8[%c0_15, %c0_16], %25 {strides = array<i32>} : memref<16x128xf32, #tpu.memory_space<vmem>>, vector<16x128xf32>,
    %c0_i32_17 = arith.constant 0 : i32
    %27 = arith.cmpi eq, %arg1, %c0_i32_17 : i32
    %28 = arith.extui %27 : i1 to i32
    %c0_i32_18 = arith.constant 0 : i32
    %29 = arith.cmpi ne, %28, %c0_i32_18 : i32
    scf.if %29 {
      %c0_19 = arith.constant 0 : index
      %c0_20 = arith.constant 0 : index
      %30 = vector.load %arg8[%c0_19, %c0_20] : memref<16x128xf32, #tpu.memory_space<vmem>>, vector<16x128xf32>
      %c0_21 = arith.constant 0 : index
      %c0_22 = arith.constant 0 : index
      %31 = vector.load %arg6[%c0_21, %c0_22] : memref<1x128xf32, #tpu.memory_space<vmem>>, vector<1x128xf32>
      %32 = vector.broadcast %31 : vector<1x128xf32> to vector<16x128xf32>
      %33 = arith.addf %30, %32 : vector<16x128xf32>
      %c0_23 = arith.constant 0 : index
      %c0_24 = arith.constant 0 : index
      %34 = vector.load %arg7[%c0_23, %c0_24] : memref<16x128xf32, #tpu.memory_space<vmem>>, vector<16x128xf32>
      tpu.vector_store %arg7[%c0_23, %c0_24], %33 {strides = array<i32>} : memref<16x128xf32, #tpu.memory_space<vmem>>, vector<16x128xf32>,
    } else {
    }
    return
  }
  func.func @transform_0(%arg0: i32, %arg1: i32) -> (i32, i32) {
    %c0_i32 = arith.constant 0 : i32
    %c0_i32_0 = arith.constant 0 : i32
    return %arg0, %c0_i32 : i32, i32
  }
  func.func @transform_1(%arg0: i32, %arg1: i32) -> (i32, i32) {
    %c0_i32 = arith.constant 0 : i32
    %c0_i32_0 = arith.constant 0 : i32
    return %c0_i32, %arg1 : i32, i32
  }
  func.func @transform_2(%arg0: i32, %arg1: i32) -> (i32, i32) {
    %c0_i32 = arith.constant 0 : i32
    %c0_i32_0 = arith.constant 0 : i32
    return %c0_i32, %arg1 : i32, i32
  }
  func.func @transform_3(%arg0: i32, %arg1: i32) -> (i32, i32) {
    %c0_i32 = arith.constant 0 : i32
    %c0_i32_0 = arith.constant 0 : i32
    return %arg1, %c0_i32 : i32, i32
  }
  func.func @transform_4(%arg0: i32, %arg1: i32) -> (i32, i32) {
    %c0_i32 = arith.constant 0 : i32
    %c0_i32_0 = arith.constant 0 : i32
    %c0_i32_1 = arith.constant 0 : i32
    return %c0_i32, %c0_i32_0 : i32, i32
  }
  func.func @transform_5(%arg0: i32, %arg1: i32) -> (i32, i32) {
    %c0_i32 = arith.constant 0 : i32
    %c0_i32_0 = arith.constant 0 : i32
    return %arg0, %c0_i32 : i32, i32
  }
}

</mosaic_0001>

<llo_original>
// kernel: tpu_custom_call.1
$region0: #{tpu_custom_call.1}
  #allocation0 [shape = 'u32[]', space=smem, size = 0x4, offset = 0x4, fixed_abs, tag = 'smem constant byte address 0x4 - core index']
  #allocation1 [shape = 'u32[144,128]{1,0:T(1,128)}', space=vmem, size = 0x12000, scoped, tag = 'internal scratch']
  #allocation2 [shape = 'f32[16,128]{1,0:T(8,128)}', space=vmem, size = 0x2000, scoped, tag = 'scratch operand']
  %s0 = inlined_call_operand.hbm [shape: f32[16,32], index: 0, kind: input, shape index: {}]
  %s1 = inlined_call_operand.hbm [shape: f32[32,128], index: 1, kind: input, shape index: {}]
  %s2 = inlined_call_operand.vmem [shape: f32[1,128], index: 2, kind: input, shape index: {}]
  %s3 = inlined_call_operand.hbm [shape: f32[128,128], index: 3, kind: input, shape index: {}]
  %s4 = inlined_call_operand.vmem [shape: f32[1,128], index: 4, kind: input, shape index: {}]
  %s5 = inlined_call_operand.hbm [shape: f32[16,128], index: 5, kind: output, shape index: {}]
  %s6 = sld [smem:[#allocation0]]
  $region50: #{tpu_custom_call.1} parent=0
    _
  %s8 = ssub.s32 1, %s6
  %s9 = scalar_select 0, %s8, %s6
  $region1: #{tpu_custom_call.1} parent=0
    #allocation3 [shape = 'u8[8192]{0}', space=vmem, size = 0x2000, scoped, tag = 'input window, operand 0, single buffered']
    #allocation4 [shape = 's32[1]{0}', space=sflag, size = 0x4, scoped, tag = 'scoped memory for tpu_custom_call.1']
    #allocation5 [shape = 's32[1]{0}', space=sflag, size = 0x4, scoped, tag = 'scoped memory for tpu_custom_call.1']
    #allocation6 [shape = 'u8[16384]{0}', space=vmem, size = 0x4000, scoped, tag = 'input window, operand 1, single buffered']
    #allocation7 [shape = 's32[1]{0}', space=sflag, size = 0x4, scoped, tag = 'scoped memory for tpu_custom_call.1']
    #allocation8 [shape = 'u8[65536]{0}', space=vmem, size = 0x10000, scoped, tag = 'input window, operand 3, single buffered']
    #allocation9 [shape = 'u8[8192]{0}', space=vmem, size = 0x2000, scoped, tag = 'output window, operand 0, single buffered']
    %10 = vsyncpa [#allocation4], 0
    %11 = vsyncpa [#allocation7], 0
    %12 = vsyncpa [#allocation5], 0
    // Predicated region
    $region2: #{tpu_custom_call.1} parent=1 // pred_check
      _
    $region3: #{tpu_custom_call.1} parent=1 // pred_check_branch
      %14 = sbr.rel (0) target = $region5
    $region4: #{tpu_custom_call.1} parent=1 // pred_region
      %s16 = ssub.s32 256, 256
      %17 = vsyncadd [#allocation4], %s16
      %s18 = sshll.u32 [#allocation3], 4
      %s19 = int_to_ptr.vmem [resolvable:$true] %s18
      %24 = dma.hbm_to_vmem [thread:$0]  %s0, 256, %s19, [#allocation4], 128, 128, 8
    $region5: #{tpu_custom_call.1} parent=1 // pred_fallthru
      _
    // Predicated region
    $region6: #{tpu_custom_call.1} parent=1 // pred_check
      _
    $region7: #{tpu_custom_call.1} parent=1 // pred_check_branch
      %26 = sbr.rel (0) target = $region9
    $region8: #{tpu_custom_call.1} parent=1 // pred_region
      %s28 = ssub.s32 512, 512
      %29 = vsyncadd [#allocation7], %s28
      %s30 = sshll.u32 [#allocation6], 4
      %s31 = int_to_ptr.vmem [resolvable:$true] %s30
      %36 = dma.hbm_to_vmem [thread:$0]  %s1, 512, %s31, [#allocation7], 128, 128, 8
    $region9: #{tpu_custom_call.1} parent=1 // pred_fallthru
      _
    // Predicated region
    $region10: #{tpu_custom_call.1} parent=1 // pred_check
      _
    $region11: #{tpu_custom_call.1} parent=1 // pred_check_branch
      %38 = sbr.rel (0) target = $region13
    $region12: #{tpu_custom_call.1} parent=1 // pred_region
      _
    $region13: #{tpu_custom_call.1} parent=1 // pred_fallthru
      _
    // Predicated region
    $region14: #{tpu_custom_call.1} parent=1 // pred_check
      _
    $region15: #{tpu_custom_call.1} parent=1 // pred_check_branch
      %40 = sbr.rel (0) target = $region17
    $region16: #{tpu_custom_call.1} parent=1 // pred_region
      %s42 = ssub.s32 2048, 2048
      %43 = vsyncadd [#allocation7], %s42
      %s44 = sshll.u32 [#allocation8], 4
      %s45 = int_to_ptr.vmem [resolvable:$true] %s44
      %50 = dma.hbm_to_vmem [thread:$0]  %s3, 2048, %s45, [#allocation7], 128, 128, 8
    $region17: #{tpu_custom_call.1} parent=1 // pred_fallthru
      _
    // Predicated region
    $region18: #{tpu_custom_call.1} parent=1 // pred_check
      _
    $region19: #{tpu_custom_call.1} parent=1 // pred_check_branch
      %52 = sbr.rel (0) target = $region21
    $region20: #{tpu_custom_call.1} parent=1 // pred_region
      _
    $region21: #{tpu_custom_call.1} parent=1 // pred_fallthru
      _
    // Predicated region
    $region22: #{tpu_custom_call.1} parent=1 // pred_check
      _
    $region23: #{tpu_custom_call.1} parent=1 // pred_check_branch
      %54 = sbr.rel (0) target = $region25
    $region24: #{tpu_custom_call.1} parent=1 // pred_region
      %55 = dma.done [#allocation4], 256
    $region25: #{tpu_custom_call.1} parent=1 // pred_fallthru
      _
    // Predicated region
    $region26: #{tpu_custom_call.1} parent=1 // pred_check
      _
    $region27: #{tpu_custom_call.1} parent=1 // pred_check_branch
      %57 = sbr.rel (0) target = $region29
    $region28: #{tpu_custom_call.1} parent=1 // pred_region
      %58 = dma.done [#allocation7], 512
    $region29: #{tpu_custom_call.1} parent=1 // pred_fallthru
      _
    // Predicated region
    $region30: #{tpu_custom_call.1} parent=1 // pred_check
      _
    $region31: #{tpu_custom_call.1} parent=1 // pred_check_branch
      %60 = sbr.rel (0) target = $region33
    $region32: #{tpu_custom_call.1} parent=1 // pred_region
      %61 = dma.done [#allocation7], 2048
    $region33: #{tpu_custom_call.1} parent=1 // pred_fallthru
      _
    %p62 = scmp.eq.s32.totalorder 0, 0
    // Predicated region
    $region34: #{tpu_custom_call.1} parent=1 // pred_check
      %p63 = pneg %p62
    $region35: #{tpu_custom_call.1} parent=1 // pred_check_branch
      %65 = sbr.rel (%p63) target = $region37
    $region36: #{tpu_custom_call.1} parent=1 // pred_region
      %66 = vst [vmem:[#allocation2] sm:$0xff] 0.0
      %67 = vst [vmem:[#allocation2 + $0x8] sm:$0xff] 0.0
    $region37: #{tpu_custom_call.1} parent=1 // pred_fallthru
      _
    %v68 = vld [vmem:[#allocation3] sm:$0xff]
    %v69 = vld [vmem:[#allocation3 + $0x8] sm:$0xff]
    %v70 = vld [vmem:[#allocation6] sm:$0xff]
    %v71 = vld [vmem:[#allocation6 + $0x8] sm:$0xff]
    %v72 = vld [vmem:[#allocation6 + $0x10] sm:$0xff]
    %v73 = vld [vmem:[#allocation6 + $0x18] sm:$0xff]
    %v74 = vld [vmem:[%s2] sm:$0x1]
    %v76 = vlaneseq
    %v77 = vshrl.u32 %v76, 7
    %v78 = vsub.s32 0, %v77
    %v79 = vrot.slane %v74, %v78
    %vm81 = vcmask 261120
    %v83 = vsel %vm81, %v68, 0
    %v86 = vsel %vm81, %v69, 0
    %88 = vmatprep.subr.mxu0 0.0
    %89 = vmatpush1.msra.mxu0 %v70
    %90 = vmatprep.subr.mxu0 0.0
    %91 = vmatpush1.msra.mxu0 %v71
    %92 = vmatprep.subr.mxu0 0.0
    %93 = vmatpush1.msra.mxu0 %v72
    %94 = vmatprep.subr.mxu0 0.0
    %95 = vmatpush1.msra.mxu0 %v73
    %96 = vmatprep.subr.mxu0 0.0
    %97 = vmatpush1.msra.mxu0 0.0
    %98 = vmatprep.subr.mxu0 0.0
    %99 = vmatpush1.msra.mxu0 0.0
    %100 = vmatprep.subr.mxu0 0.0
    %101 = vmatpush1.msra.mxu0 0.0
    %102 = vmatprep.subr.mxu0 0.0
    %103 = vmatpush1.msra.mxu0 0.0
    %104 = vmatprep.subr.mxu0 0.0
    %105 = vmatpush1.msra.mxu0 0.0
    %106 = vmatprep.subr.mxu0 0.0
    %107 = vmatpush1.msra.mxu0 0.0
    %108 = vmatprep.subr.mxu0 0.0
    %109 = vmatpush1.msra.mxu0 0.0
    %110 = vmatprep.subr.mxu0 0.0
    %111 = vmatpush1.msra.mxu0 0.0
    %112 = vmatprep.subr.mxu0 0.0
    %113 = vmatpush1.msra.mxu0 0.0
    %114 = vmatprep.subr.mxu0 0.0
    %115 = vmatpush1.msra.mxu0 0.0
    %116 = vmatprep.subr.mxu0 0.0
    %117 = vmatpush1.msra.mxu0 0.0
    %118 = vmatprep.subr.mxu0 0.0
    %119 = vmatpush1.msra.mxu0 0.0
    %120 = vmatprep.subr.mxu0 0.0
    %121 = vmatpush1.msra.mxu0 0.0
    %122 = vmatprep.subr.mxu0 0.0
    %123 = vmatpush1.msra.mxu0 0.0
    %124 = vmatprep.subr.mxu0 0.0
    %125 = vmatpush1.msra.mxu0 0.0
    %126 = vmatprep.subr.mxu0 0.0
    %127 = vmatpush1.msra.mxu0 0.0
    %128 = vmatprep.subr.mxu0 0.0
    %129 = vmatpush1.msra.mxu0 0.0
    %130 = vmatprep.subr.mxu0 0.0
    %131 = vmatpush1.msra.mxu0 0.0
    %132 = vmatprep.subr.mxu0 0.0
    %133 = vmatpush1.msra.mxu0 0.0
    %134 = vmatprep.subr.mxu0 0.0
    %135 = vmatpush1.msra.mxu0 0.0
    %136 = vmatprep.subr.mxu0 0.0
    %137 = vmatpush1.msra.mxu0 0.0
    %138 = vmatprep.subr.mxu0 0.0
    %139 = vmatpush1.msra.mxu0 0.0
    %140 = vmatprep.subr.mxu0 0.0
    %141 = vmatpush1.msra.mxu0 0.0
    %142 = vmatprep.subr.mxu0 0.0
    %143 = vmatpush1.msra.mxu0 0.0
    %144 = vmatprep.subr.mxu0 0.0
    %145 = vmatpush1.msra.mxu0 0.0
    %146 = vmatprep.subr.mxu0 0.0
    %147 = vmatpush1.msra.mxu0 0.0
    %148 = vmatprep.subr.mxu0 0.0
    %149 = vmatpush1.msra.mxu0 0.0
    %150 = vmatprep.subr.mxu0 0.0
    %151 = vmatpush1.msra.mxu0 0.0
    %152 = vmatprep.mubr.f32.mxu0 0.0
    %153 = vmatmul.mubr.f32.gmra.mrb[0].mxu0 %v83
    %v154 = vpop.f32.mrb[0].mxu0
    %v155 = vadd.f32 %v79, %v154
    %v156 = vpop.f32.mrb[0].mxu0
    %157 = vmatprep.mubr.f32.mxu0 0.0
    %158 = vmatmul.mubr.f32.gmra.mrb[0].mxu0 %v86
    %v159 = vpop.f32.mrb[0].mxu0
    %v160 = vadd.f32 %v79, %v159
    %v161 = vpop.f32.mrb[0].mxu0
    %162 = vdwg.mxu0
    %v163 = vmul.f32 %v155, 0.5
    %v164 = vmul.f32 %v160, 0.5
    %v165 = vmul.f32 %v155, 0.044715
    %v166 = vmul.f32 %v160, 0.044715
    %v167 = vmul.f32 %v165, %v155
    %v168 = vmul.f32 %v166, %v160
    %v169 = vmul.f32 %v167, %v155
    %v170 = vmul.f32 %v168, %v160
    %v171 = vadd.f32 %v155, %v169
    %v172 = vadd.f32 %v160, %v170
    %v173 = vmul.f32 %v171, 0.7978846
    %v174 = vmul.f32 %v172, 0.7978846
    %v175 = vtanh.pop %v173
    %v176 = vtanh.pop %v174
    %v177 = vadd.f32 %v175, 1.0
    %v178 = vadd.f32 %v176, 1.0
    %v179 = vmul.f32 %v163, %v177
    %v180 = vmul.f32 %v164, %v178
    %v181 = vld [vmem:[#allocation2] sm:$0xff]
    %v182 = vld [vmem:[#allocation2 + $0x8] sm:$0xff]
    %v183 = vld [vmem:[#allocation8] sm:$0xff]
    %v184 = vld [vmem:[#allocation8 + $0x8] sm:$0xff]
    %v185 = vld [vmem:[#allocation8 + $0x10] sm:$0xff]
    %v186 = vld [vmem:[#allocation8 + $0x18] sm:$0xff]
    %v187 = vld [vmem:[#allocation8 + $0x20] sm:$0xff]
    %v188 = vld [vmem:[#allocation8 + $0x28] sm:$0xff]
    %v189 = vld [vmem:[#allocation8 + $0x30] sm:$0xff]
    %v190 = vld [vmem:[#allocation8 + $0x38] sm:$0xff]
    %v191 = vld [vmem:[#allocation8 + $0x40] sm:$0xff]
    %v192 = vld [vmem:[#allocation8 + $0x48] sm:$0xff]
    %v193 = vld [vmem:[#allocation8 + $0x50] sm:$0xff]
    %v194 = vld [vmem:[#allocation8 + $0x58] sm:$0xff]
    %v195 = vld [vmem:[#allocation8 + $0x60] sm:$0xff]
    %v196 = vld [vmem:[#allocation8 + $0x68] sm:$0xff]
    %v197 = vld [vmem:[#allocation8 + $0x70] sm:$0xff]
    %v198 = vld [vmem:[#allocation8 + $0x78] sm:$0xff]
    %199 = vmatprep.subr.mxu0 0.0
    %200 = vmatpush1.msra.mxu0 %v183
    %201 = vmatprep.subr.mxu0 0.0
    %202 = vmatpush1.msra.mxu0 %v184
    %203 = vmatprep.subr.mxu0 0.0
    %204 = vmatpush1.msra.mxu0 %v185
    %205 = vmatprep.subr.mxu0 0.0
    %206 = vmatpush1.msra.mxu0 %v186
    %207 = vmatprep.subr.mxu0 0.0
    %208 = vmatpush1.msra.mxu0 %v187
    %209 = vmatprep.subr.mxu0 0.0
    %210 = vmatpush1.msra.mxu0 %v188
    %211 = vmatprep.subr.mxu0 0.0
    %212 = vmatpush1.msra.mxu0 %v189
    %213 = vmatprep.subr.mxu0 0.0
    %214 = vmatpush1.msra.mxu0 %v190
    %215 = vmatprep.subr.mxu0 0.0
    %216 = vmatpush1.msra.mxu0 %v191
    %217 = vmatprep.subr.mxu0 0.0
    %218 = vmatpush1.msra.mxu0 %v192
    %219 = vmatprep.subr.mxu0 0.0
    %220 = vmatpush1.msra.mxu0 %v193
    %221 = vmatprep.subr.mxu0 0.0
    %222 = vmatpush1.msra.mxu0 %v194
    %223 = vmatprep.subr.mxu0 0.0
    %224 = vmatpush1.msra.mxu0 %v195
    %225 = vmatprep.subr.mxu0 0.0
    %226 = vmatpush1.msra.mxu0 %v196
    %227 = vmatprep.subr.mxu0 0.0
    %228 = vmatpush1.msra.mxu0 %v197
    %229 = vmatprep.subr.mxu0 0.0
    %230 = vmatpush1.msra.mxu0 %v198
    %231 = vmatprep.subr.mxu0 0.0
    %232 = vmatpush1.msra.mxu0 0.0
    %233 = vmatprep.subr.mxu0 0.0
    %234 = vmatpush1.msra.mxu0 0.0
    %235 = vmatprep.subr.mxu0 0.0
    %236 = vmatpush1.msra.mxu0 0.0
    %237 = vmatprep.subr.mxu0 0.0
    %238 = vmatpush1.msra.mxu0 0.0
    %239 = vmatprep.subr.mxu0 0.0
    %240 = vmatpush1.msra.mxu0 0.0
    %241 = vmatprep.subr.mxu0 0.0
    %242 = vmatpush1.msra.mxu0 0.0
    %243 = vmatprep.subr.mxu0 0.0
    %244 = vmatpush1.msra.mxu0 0.0
    %245 = vmatprep.subr.mxu0 0.0
    %246 = vmatpush1.msra.mxu0 0.0
    %247 = vmatprep.subr.mxu0 0.0
    %248 = vmatpush1.msra.mxu0 0.0
    %249 = vmatprep.subr.mxu0 0.0
    %250 = vmatpush1.msra.mxu0 0.0
    %251 = vmatprep.subr.mxu0 0.0
    %252 = vmatpush1.msra.mxu0 0.0
    %253 = vmatprep.subr.mxu0 0.0
    %254 = vmatpush1.msra.mxu0 0.0
    %255 = vmatprep.subr.mxu0 0.0
    %256 = vmatpush1.msra.mxu0 0.0
    %257 = vmatprep.subr.mxu0 0.0
    %258 = vmatpush1.msra.mxu0 0.0
    %259 = vmatprep.subr.mxu0 0.0
    %260 = vmatpush1.msra.mxu0 0.0
    %261 = vmatprep.subr.mxu0 0.0
    %262 = vmatpush1.msra.mxu0 0.0
    %263 = vmatprep.mubr.f32.mxu0 0.0
    %264 = vmatmul.mubr.f32.gmra.mrb[0].mxu0 %v179
    %v265 = vpop.f32.mrb[0].mxu0
    %v266 = vadd.f32 0.0, %v265
    %v267 = vpop.f32.mrb[0].mxu0
    %268 = vmatprep.mubr.f32.mxu0 0.0
    %269 = vmatmul.mubr.f32.gmra.mrb[0].mxu0 %v180
    %v270 = vpop.f32.mrb[0].mxu0
    %v271 = vadd.f32 0.0, %v270
    %v272 = vpop.f32.mrb[0].mxu0
    %273 = vdwg.mxu0
    %v274 = vadd.f32 %v181, %v266
    %v275 = vadd.f32 %v182, %v271
    %276 = vst [vmem:[#allocation2] sm:$0xff] %v274
    %277 = vst [vmem:[#allocation2 + $0x8] sm:$0xff] %v275
    // Predicated region
    $region38: #{tpu_custom_call.1} parent=1 // pred_check
      %p278 = pneg %p62
    $region39: #{tpu_custom_call.1} parent=1 // pred_check_branch
      %280 = sbr.rel (%p278) target = $region41
    $region40: #{tpu_custom_call.1} parent=1 // pred_region
      %v281 = vld [vmem:[#allocation2] sm:$0xff]
      %v282 = vld [vmem:[#allocation2 + $0x8] sm:$0xff]
      %v283 = vld [vmem:[%s4] sm:$0x1]
      %v285 = vlaneseq
      %v286 = vshrl.u32 %v285, 7
      %v287 = vsub.s32 0, %v286
      %v288 = vrot.slane %v283, %v287
      %v290 = vadd.f32 %v281, %v288
      %v291 = vadd.f32 %v282, %v288
      %292 = vst [vmem:[#allocation9] sm:$0xff] %v290
      %293 = vst [vmem:[#allocation9 + $0x8] sm:$0xff] %v291
    $region41: #{tpu_custom_call.1} parent=1 // pred_fallthru
      _
    // Predicated region
    $region42: #{tpu_custom_call.1} parent=1 // pred_check
      _
    $region43: #{tpu_custom_call.1} parent=1 // pred_check_branch
      %295 = sbr.rel (0) target = $region45
    $region44: #{tpu_custom_call.1} parent=1 // pred_region
      %s297 = ssub.s32 256, 256
      %298 = vsyncadd [#allocation5], %s297
      %s299 = sshll.u32 [#allocation9], 4
      %s300 = int_to_ptr.vmem [resolvable:$true] %s299
      %305 = dma.vmem_to_hbm [thread:$0]  %s300, 256, %s5, [#allocation5], 128, 128, 8
    $region45: #{tpu_custom_call.1} parent=1 // pred_fallthru
      _
    // Predicated region
    $region46: #{tpu_custom_call.1} parent=1 // pred_check
      _
    $region47: #{tpu_custom_call.1} parent=1 // pred_check_branch
      %307 = sbr.rel (0) target = $region49
    $region48: #{tpu_custom_call.1} parent=1 // pred_region
      %308 = dma.done [#allocation5], 256
    $region49: #{tpu_custom_call.1} parent=1 // pred_fallthru
      _
    %309 = vsyncpa [#allocation4], 1
    %310 = vsyncpa [#allocation7], 1
    %311 = vsyncpa [#allocation5], 1

</llo_original>
